<compile_context>
chip_gen: v7x
topology: tpu7x:2x2x1
jax: 0.10.0
libtpu: 0.0.40
codegen_flags: <defaults>
</compile_context>

<pallas_src>
import jax
import jax.numpy as jnp
from jax.experimental import pallas as pl
from jax.experimental.pallas import tpu as pltpu  # noqa: F401  (TPU backend)


# -----------------------------------------------------------------------------
# Single fused kernel: whole forward pass, all intermediates live in VMEM/vregs
# -----------------------------------------------------------------------------
def _make_fused_kernel(num_extra_layers, scale, hidden_dim, prop_first,
                       compute_dtype):
    f32 = jnp.float32
    if compute_dtype == f32:
        cast = lambda v: v                       # noqa: E731
    else:
        cast = lambda v: v.astype(compute_dtype)  # noqa: E731

    def kernel(a_ref, x_ref, pd_ref, c1w_ref, c1b_ref, *rest):
        if num_extra_layers > 0:
            cw_ref, cb_ref = rest[0], rest[1]
            rest = rest[2:]
        f1w_ref, f1b_ref, f2w_ref, f2b_ref, f3w_ref, f3b_ref, o_ref = rest

        a = a_ref[...]                                            # [N, N] resident

        # ---- GCN layer 1: relu( A @ X @ W1 + b ), cheaper association first --
        if prop_first:                       # F <= H : (A @ X) @ W1
            ax = jnp.dot(a, x_ref[...], preferred_element_type=f32)
            h = jnp.dot(cast(ax), c1w_ref[...], preferred_element_type=f32)
        else:                                # (X @ W1) then propagate
            xw = jnp.dot(x_ref[...], c1w_ref[...], preferred_element_type=f32)
            h = jnp.dot(a, cast(xw), preferred_element_type=f32)
        h = jnp.maximum(h + c1b_ref[...], 0.0)

        # ---- remaining GCN layers (statically unrolled) ----------------------
        for i in range(num_extra_layers):
            hw = jnp.dot(cast(h), cw_ref[i], preferred_element_type=f32)
            h = jnp.dot(a, cast(hw), preferred_element_type=f32)
            h = jnp.maximum(h + cb_ref[i], 0.0)

        # ---- MultiScale + mean pooling + fc1 ---------------------------------
        # pool @ D_s was hoisted to the wrapper (pd_ref[s] = pool @ D_s), so
        # only the activation-dependent [B,N]@[N,H] products remain here.
        # TODO(synk): MultiScaleLayer source not provided; modeled as a dense
        #             framelet transform followed by per-graph mean pooling.
        hc = cast(h)
        f1w = f1w_ref[...]                                        # [scale*H, H]
        H = hidden_dim
        acc = None
        for s in range(scale):                                    # static unroll
            ps = jnp.dot(pd_ref[s], hc, preferred_element_type=f32)      # [B, H]
            term = jnp.dot(cast(ps), f1w[s * H:(s + 1) * H, :],
                           preferred_element_type=f32)                   # [B, H]
            acc = term if acc is None else acc + term
        h1 = jnp.maximum(acc + f1b_ref[...], 0.0)                 # relu(fc1)

        # ---- fc2 (relu) -> fc3 -> log_softmax (dropout = identity in eval) ---
        h2 = jnp.dot(cast(h1), f2w_ref[...], preferred_element_type=f32) \
            + f2b_ref[...]
        h2 = jnp.maximum(h2, 0.0)
        z = jnp.dot(cast(h2), f3w_ref[...], preferred_element_type=f32) \
            + f3b_ref[...]
        m = jnp.max(z, axis=-1, keepdims=True)
        lse = jnp.log(jnp.sum(jnp.exp(z - m), axis=-1, keepdims=True)) + m
        o_ref[...] = (z - lse).astype(o_ref.dtype)                # only HBM store

    return kernel


def _full_spec(shape):
    nd = len(shape)
    return pl.BlockSpec(shape, lambda: (0,) * nd)


# -----------------------------------------------------------------------------
# Model forward (non-mixup path, eval mode) — one pallas_call
# -----------------------------------------------------------------------------
def model_forward(params, x, a_norm, d_frame, pool_mat,
                  compute_dtype=jnp.float32):
    n, num_feat = x.shape
    hid = params["conv1_w"].shape[1]
    scale = d_frame.shape[0] // n
    b = pool_mat.shape[0]
    num_classes = params["fc3_w"].shape[1]
    num_extra = len(params["convs"])
    f32 = jnp.float32
    cd = compute_dtype

    # Hoist the activation-independent product pool @ D_s out of the kernel.
    d3 = d_frame.reshape(scale, n, n)                            # scale-major view
    pd = jnp.einsum('bn,snm->sbm', pool_mat, d3)                 # [scale, B, N]

    c1b = params["conv1_b"].reshape(1, hid).astype(f32)
    f1b = params["fc1_b"].reshape(1, hid).astype(f32)
    f2b = params["fc2_b"].reshape(1, hid // 2).astype(f32)
    f3b = params["fc3_b"].reshape(1, num_classes).astype(f32)

    args = [a_norm.astype(cd), x.astype(cd), pd.astype(cd),
            params["conv1_w"].astype(cd), c1b]
    if num_extra > 0:                                            # no dummy tensors
        cw = jnp.stack([w for w, _ in params["convs"]]).astype(cd)   # [L-1, H, H]
        cb = jnp.stack([bb for _, bb in params["convs"]]).astype(f32)  # [L-1, H]
        args += [cw, cb]
    args += [params["fc1_w"].astype(cd), f1b,
             params["fc2_w"].astype(cd), f2b,
             params["fc3_w"].astype(cd), f3b]

    kernel = _make_fused_kernel(num_extra, scale, hid,
                                prop_first=(num_feat <= hid),
                                compute_dtype=cd)

    return pl.pallas_call(
        kernel,
        out_shape=jax.ShapeDtypeStruct((b, num_classes), jnp.float32),
        in_specs=[_full_spec(a.shape) for a in args],
        out_specs=_full_spec((b, num_classes)),
    )(*args)


# -----------------------------------------------------------------------------
# Pure-JAX reference (original, un-reassociated order) for correctness check
# -----------------------------------------------------------------------------
def reference_forward(params, x, a_norm, d_frame, pool_mat):
    h = jnp.maximum(a_norm @ (x @ params["conv1_w"]) + params["conv1_b"], 0.0)
    for w, bb in params["convs"]:
        h = jnp.maximum(a_norm @ (h @ w) + bb, 0.0)
    n, hid = h.shape
    scale = d_frame.shape[0] // n
    coeffs = d_frame @ h
    c2 = jnp.transpose(coeffs.reshape(scale, n, hid), (1, 0, 2)).reshape(n, scale * hid)
    pooled = pool_mat @ c2
    h1 = jnp.maximum(pooled @ params["fc1_w"] + params["fc1_b"], 0.0)
    h2 = jnp.maximum(h1 @ params["fc2_w"] + params["fc2_b"], 0.0)
    z = h2 @ params["fc3_w"] + params["fc3_b"]
    return jax.nn.log_softmax(z, axis=-1)


# -----------------------------------------------------------------------------
# Deterministic parameter / data construction
# -----------------------------------------------------------------------------
def init_params(key, num_features, hidden_dim, num_layers, num_classes, scale):
    ks = jax.random.split(key, 6 + 2 * (num_layers - 1))
    kidx = iter(range(len(ks)))

    def lin(k, fan_in, fan_out):
        w = jax.random.normal(k, (fan_in, fan_out), jnp.float32) / jnp.sqrt(fan_in)
        bb = jnp.zeros((fan_out,), jnp.float32)
        return w, bb

    params = {}
    params["conv1_w"], params["conv1_b"] = lin(ks[next(kidx)], num_features, hidden_dim)
    convs = []
    for _ in range(num_layers - 1):
        convs.append(lin(ks[next(kidx)], hidden_dim, hidden_dim))
    params["convs"] = convs
    params["fc1_w"], params["fc1_b"] = lin(ks[next(kidx)], scale * hidden_dim, hidden_dim)
    params["fc2_w"], params["fc2_b"] = lin(ks[next(kidx)], hidden_dim, hidden_dim // 2)
    params["fc3_w"], params["fc3_b"] = lin(ks[next(kidx)], hidden_dim // 2, num_classes)
    return params


def build_graph_operators(key, num_nodes, batch, scale):
    k_e, k_d = jax.random.split(key, 2)

    # random undirected edges -> normalized adjacency with self-loops (GCNConv)
    num_edges = 3 * num_nodes
    src = jax.random.randint(k_e, (num_edges,), 0, num_nodes)
    dst = jax.random.randint(jax.random.fold_in(k_e, 1), (num_edges,), 0, num_nodes)
    adj = jnp.zeros((num_nodes, num_nodes), jnp.float32)
    adj = adj.at[src, dst].set(1.0)
    adj = jnp.maximum(adj, adj.T)
    adj = adj + jnp.eye(num_nodes, dtype=jnp.float32)          # self loops
    deg = jnp.sum(adj, axis=1)
    d_inv_sqrt = 1.0 / jnp.sqrt(deg)
    a_norm = adj * d_inv_sqrt[:, None] * d_inv_sqrt[None, :]

    # dense multi-scale (framelet) transform: [scale*N, N]
    d_frame = jax.random.normal(k_d, (scale * num_nodes, num_nodes), jnp.float32)
    d_frame = d_frame * (jax.random.uniform(
        jax.random.fold_in(k_d, 1), (scale * num_nodes, num_nodes)) < 0.3)

    # per-graph mean-pooling matrix [B, N]
    batch_size = int(batch.max()) + 1
    onehot = (batch[None, :] == jnp.arange(batch_size)[:, None]).astype(jnp.float32)
    counts = jnp.sum(onehot, axis=1, keepdims=True)
    pool_mat = onehot / jnp.maximum(counts, 1.0)

    return a_norm, d_frame, pool_mat


# -----------------------------------------------------------------------------
if __name__ == "__main__":
    # args-equivalent hyper-parameters (small shapes)
    num_features = 16
    hidden_dim = 32
    num_layers = 3
    num_classes = 4
    r, Lev = 2, 2
    scale = (r - 1) * Lev + 1          # = 3
    num_nodes = 16
    batch_size = 2

    key = jax.random.PRNGKey(0)
    k_param, k_x, k_graph = jax.random.split(key, 3)

    params = init_params(k_param, num_features, hidden_dim, num_layers,
                         num_classes, scale)

    x = jax.random.normal(k_x, (num_nodes, num_features), jnp.float32)
    batch = jnp.array([0] * (num_nodes // 2) + [1] * (num_nodes - num_nodes // 2),
                      dtype=jnp.int32)
    a_norm, d_frame, pool_mat = build_graph_operators(k_graph, num_nodes, batch, scale)

    ref = reference_forward(params, x, a_norm, d_frame, pool_mat)

    # f32 path: tight check against the un-fused / un-reassociated reference
    out = model_forward(params, x, a_norm, d_frame, pool_mat)
    out = jax.block_until_ready(out)
    assert out.shape == (batch_size, num_classes)
    assert jnp.allclose(jnp.sum(jnp.exp(out), axis=-1), 1.0, atol=1e-4)
    assert jnp.allclose(out, ref, atol=5e-4, rtol=5e-4)

    # bf16 MXU path (f32 accumulation, f32 biases/log_softmax): loose check
    out_bf16 = model_forward(params, x, a_norm, d_frame, pool_mat,
                             compute_dtype=jnp.bfloat16)
    out_bf16 = jax.block_until_ready(out_bf16)
    assert out_bf16.shape == (batch_size, num_classes)
    assert jnp.allclose(jnp.sum(jnp.exp(out_bf16), axis=-1), 1.0, atol=1e-3)
    assert jnp.allclose(out_bf16, ref, atol=2e-1, rtol=2e-1)

    print("KERNEL_OK")
</pallas_src>

<mosaic_0001>
module attributes {stable_mosaic.version = 11 : i64} {
  func.func @kernel(%arg0: memref<16x16xf32, #tpu.memory_space<vmem>>, %arg1: memref<16x16xf32, #tpu.memory_space<vmem>>, %arg2: memref<3x2x16xf32, #tpu.memory_space<vmem>>, %arg3: memref<16x32xf32, #tpu.memory_space<vmem>>, %arg4: memref<1x32xf32, #tpu.memory_space<vmem>>, %arg5: memref<2x32x32xf32, #tpu.memory_space<vmem>>, %arg6: memref<2x32xf32, #tpu.memory_space<vmem>>, %arg7: memref<96x32xf32, #tpu.memory_space<vmem>>, %arg8: memref<1x32xf32, #tpu.memory_space<vmem>>, %arg9: memref<32x16xf32, #tpu.memory_space<vmem>>, %arg10: memref<1x16xf32, #tpu.memory_space<vmem>>, %arg11: memref<16x4xf32, #tpu.memory_space<vmem>>, %arg12: memref<1x4xf32, #tpu.memory_space<vmem>>, %arg13: memref<2x4xf32, #tpu.memory_space<vmem>>) attributes {dimension_semantics = [], scalar_prefetch = 0 : i64, scratch_operands = 0 : i64, tpu.core_type = #tpu.core_type<tc>} {
    %c0 = arith.constant 0 : index
    %c0_0 = arith.constant 0 : index
    %0 = vector.load %arg0[%c0, %c0_0] : memref<16x16xf32, #tpu.memory_space<vmem>>, vector<16x16xf32>
    %c0_1 = arith.constant 0 : index
    %c0_2 = arith.constant 0 : index
    %1 = vector.load %arg1[%c0_1, %c0_2] : memref<16x16xf32, #tpu.memory_space<vmem>>, vector<16x16xf32>
    %cst = arith.constant dense<0.000000e+00> : vector<16x16xf32>
    %2 = tpu.matmul %0, %1, %cst {dimension_numbers = #tpu.dot_dimension_numbers<[1], [0], [0], [1], [0, 0, 1, 1], [], []>} : vector<16x16xf32>, vector<16x16xf32>, vector<16x16xf32> -> vector<16x16xf32>
    %c0_3 = arith.constant 0 : index
    %c0_4 = arith.constant 0 : index
    %3 = vector.load %arg3[%c0_3, %c0_4] : memref<16x32xf32, #tpu.memory_space<vmem>>, vector<16x32xf32>
    %cst_5 = arith.constant dense<0.000000e+00> : vector<16x32xf32>
    %4 = tpu.matmul %2, %3, %cst_5 {dimension_numbers = #tpu.dot_dimension_numbers<[1], [0], [0], [1], [0, 0, 1, 1], [], []>} : vector<16x16xf32>, vector<16x32xf32>, vector<16x32xf32> -> vector<16x32xf32>
    %c0_6 = arith.constant 0 : index
    %c0_7 = arith.constant 0 : index
    %5 = vector.load %arg4[%c0_6, %c0_7] : memref<1x32xf32, #tpu.memory_space<vmem>>, vector<1x32xf32>
    %6 = vector.broadcast %5 : vector<1x32xf32> to vector<16x32xf32>
    %7 = arith.addf %4, %6 : vector<16x32xf32>
    %cst_8 = arith.constant 0.000000e+00 : f32
    %8 = vector.broadcast %cst_8 : f32 to vector<16x32xf32>
    %9 = arith.maximumf %7, %8 : vector<16x32xf32>
    %c0_9 = arith.constant 0 : index
    %c0_10 = arith.constant 0 : index
    %c0_11 = arith.constant 0 : index
    %10 = vector.load %arg5[%c0_9, %c0_10, %c0_11] : memref<2x32x32xf32, #tpu.memory_space<vmem>>, vector<1x32x32xf32>
    %11 = vector.shape_cast %10 : vector<1x32x32xf32> to vector<32x32xf32>
    %cst_12 = arith.constant dense<0.000000e+00> : vector<16x32xf32>
    %12 = tpu.matmul %9, %11, %cst_12 {dimension_numbers = #tpu.dot_dimension_numbers<[1], [0], [0], [1], [0, 0, 1, 1], [], []>} : vector<16x32xf32>, vector<32x32xf32>, vector<16x32xf32> -> vector<16x32xf32>
    %cst_13 = arith.constant dense<0.000000e+00> : vector<16x32xf32>
    %13 = tpu.matmul %0, %12, %cst_13 {dimension_numbers = #tpu.dot_dimension_numbers<[1], [0], [0], [1], [0, 0, 1, 1], [], []>} : vector<16x16xf32>, vector<16x32xf32>, vector<16x32xf32> -> vector<16x32xf32>
    %c0_14 = arith.constant 0 : index
    %c0_15 = arith.constant 0 : index
    %14 = vector.load %arg6[%c0_14, %c0_15] : memref<2x32xf32, #tpu.memory_space<vmem>>, vector<1x32xf32>
    %15 = vector.shape_cast %14 : vector<1x32xf32> to vector<32xf32>
    %16 = vector.shape_cast %15 : vector<32xf32> to vector<1x32xf32>
    %17 = vector.broadcast %16 : vector<1x32xf32> to vector<16x32xf32>
    %18 = arith.addf %13, %17 : vector<16x32xf32>
    %cst_16 = arith.constant 0.000000e+00 : f32
    %19 = vector.broadcast %cst_16 : f32 to vector<16x32xf32>
    %20 = arith.maximumf %18, %19 : vector<16x32xf32>
    %c1 = arith.constant 1 : index
    %c0_17 = arith.constant 0 : index
    %c0_18 = arith.constant 0 : index
    %21 = vector.load %arg5[%c1, %c0_17, %c0_18] : memref<2x32x32xf32, #tpu.memory_space<vmem>>, vector<1x32x32xf32>
    %22 = vector.shape_cast %21 : vector<1x32x32xf32> to vector<32x32xf32>
    %cst_19 = arith.constant dense<0.000000e+00> : vector<16x32xf32>
    %23 = tpu.matmul %20, %22, %cst_19 {dimension_numbers = #tpu.dot_dimension_numbers<[1], [0], [0], [1], [0, 0, 1, 1], [], []>} : vector<16x32xf32>, vector<32x32xf32>, vector<16x32xf32> -> vector<16x32xf32>
    %cst_20 = arith.constant dense<0.000000e+00> : vector<16x32xf32>
    %24 = tpu.matmul %0, %23, %cst_20 {dimension_numbers = #tpu.dot_dimension_numbers<[1], [0], [0], [1], [0, 0, 1, 1], [], []>} : vector<16x16xf32>, vector<16x32xf32>, vector<16x32xf32> -> vector<16x32xf32>
    %c1_21 = arith.constant 1 : index
    %c0_22 = arith.constant 0 : index
    %25 = vector.load %arg6[%c1_21, %c0_22] : memref<2x32xf32, #tpu.memory_space<vmem>>, vector<1x32xf32>
    %26 = vector.shape_cast %25 : vector<1x32xf32> to vector<32xf32>
    %27 = vector.shape_cast %26 : vector<32xf32> to vector<1x32xf32>
    %28 = vector.broadcast %27 : vector<1x32xf32> to vector<16x32xf32>
    %29 = arith.addf %24, %28 : vector<16x32xf32>
    %cst_23 = arith.constant 0.000000e+00 : f32
    %30 = vector.broadcast %cst_23 : f32 to vector<16x32xf32>
    %31 = arith.maximumf %29, %30 : vector<16x32xf32>
    %c0_24 = arith.constant 0 : index
    %c0_25 = arith.constant 0 : index
    %32 = vector.load %arg7[%c0_24, %c0_25] : memref<96x32xf32, #tpu.memory_space<vmem>>, vector<96x32xf32>
    %c0_26 = arith.constant 0 : index
    %c0_27 = arith.constant 0 : index
    %c0_28 = arith.constant 0 : index
    %33 = vector.load %arg2[%c0_26, %c0_27, %c0_28] : memref<3x2x16xf32, #tpu.memory_space<vmem>>, vector<1x2x16xf32>
    %34 = vector.shape_cast %33 : vector<1x2x16xf32> to vector<2x16xf32>
    %cst_29 = arith.constant dense<0.000000e+00> : vector<2x32xf32>
    %35 = tpu.matmul %34, %31, %cst_29 {dimension_numbers = #tpu.dot_dimension_numbers<[1], [0], [0], [1], [0, 0, 1, 1], [], []>} : vector<2x16xf32>, vector<16x32xf32>, vector<2x32xf32> -> vector<2x32xf32>
    %36 = vector.extract_strided_slice %32 {offsets = [0, 0], sizes = [32, 32], strides = [1, 1]} : vector<96x32xf32> to vector<32x32xf32>
    %cst_30 = arith.constant dense<0.000000e+00> : vector<2x32xf32>
    %37 = tpu.matmul %35, %36, %cst_30 {dimension_numbers = #tpu.dot_dimension_numbers<[1], [0], [0], [1], [0, 0, 1, 1], [], []>} : vector<2x32xf32>, vector<32x32xf32>, vector<2x32xf32> -> vector<2x32xf32>
    %c1_31 = arith.constant 1 : index
    %c0_32 = arith.constant 0 : index
    %c0_33 = arith.constant 0 : index
    %38 = vector.load %arg2[%c1_31, %c0_32, %c0_33] : memref<3x2x16xf32, #tpu.memory_space<vmem>>, vector<1x2x16xf32>
    %39 = vector.shape_cast %38 : vector<1x2x16xf32> to vector<2x16xf32>
    %cst_34 = arith.constant dense<0.000000e+00> : vector<2x32xf32>
    %40 = tpu.matmul %39, %31, %cst_34 {dimension_numbers = #tpu.dot_dimension_numbers<[1], [0], [0], [1], [0, 0, 1, 1], [], []>} : vector<2x16xf32>, vector<16x32xf32>, vector<2x32xf32> -> vector<2x32xf32>
    %41 = vector.extract_strided_slice %32 {offsets = [32, 0], sizes = [32, 32], strides = [1, 1]} : vector<96x32xf32> to vector<32x32xf32>
    %cst_35 = arith.constant dense<0.000000e+00> : vector<2x32xf32>
    %42 = tpu.matmul %40, %41, %cst_35 {dimension_numbers = #tpu.dot_dimension_numbers<[1], [0], [0], [1], [0, 0, 1, 1], [], []>} : vector<2x32xf32>, vector<32x32xf32>, vector<2x32xf32> -> vector<2x32xf32>
    %43 = arith.addf %37, %42 : vector<2x32xf32>
    %c2 = arith.constant 2 : index
    %c0_36 = arith.constant 0 : index
    %c0_37 = arith.constant 0 : index
    %44 = vector.load %arg2[%c2, %c0_36, %c0_37] : memref<3x2x16xf32, #tpu.memory_space<vmem>>, vector<1x2x16xf32>
    %45 = vector.shape_cast %44 : vector<1x2x16xf32> to vector<2x16xf32>
    %cst_38 = arith.constant dense<0.000000e+00> : vector<2x32xf32>
    %46 = tpu.matmul %45, %31, %cst_38 {dimension_numbers = #tpu.dot_dimension_numbers<[1], [0], [0], [1], [0, 0, 1, 1], [], []>} : vector<2x16xf32>, vector<16x32xf32>, vector<2x32xf32> -> vector<2x32xf32>
    %47 = vector.extract_strided_slice %32 {offsets = [64, 0], sizes = [32, 32], strides = [1, 1]} : vector<96x32xf32> to vector<32x32xf32>
    %cst_39 = arith.constant dense<0.000000e+00> : vector<2x32xf32>
    %48 = tpu.matmul %46, %47, %cst_39 {dimension_numbers = #tpu.dot_dimension_numbers<[1], [0], [0], [1], [0, 0, 1, 1], [], []>} : vector<2x32xf32>, vector<32x32xf32>, vector<2x32xf32> -> vector<2x32xf32>
    %49 = arith.addf %43, %48 : vector<2x32xf32>
    %c0_40 = arith.constant 0 : index
    %c0_41 = arith.constant 0 : index
    %50 = vector.load %arg8[%c0_40, %c0_41] : memref<1x32xf32, #tpu.memory_space<vmem>>, vector<1x32xf32>
    %51 = vector.broadcast %50 : vector<1x32xf32> to vector<2x32xf32>
    %52 = arith.addf %49, %51 : vector<2x32xf32>
    %cst_42 = arith.constant 0.000000e+00 : f32
    %53 = vector.broadcast %cst_42 : f32 to vector<2x32xf32>
    %54 = arith.maximumf %52, %53 : vector<2x32xf32>
    %c0_43 = arith.constant 0 : index
    %c0_44 = arith.constant 0 : index
    %55 = vector.load %arg9[%c0_43, %c0_44] : memref<32x16xf32, #tpu.memory_space<vmem>>, vector<32x16xf32>
    %cst_45 = arith.constant dense<0.000000e+00> : vector<2x16xf32>
    %56 = tpu.matmul %54, %55, %cst_45 {dimension_numbers = #tpu.dot_dimension_numbers<[1], [0], [0], [1], [0, 0, 1, 1], [], []>} : vector<2x32xf32>, vector<32x16xf32>, vector<2x16xf32> -> vector<2x16xf32>
    %c0_46 = arith.constant 0 : index
    %c0_47 = arith.constant 0 : index
    %57 = vector.load %arg10[%c0_46, %c0_47] : memref<1x16xf32, #tpu.memory_space<vmem>>, vector<1x16xf32>
    %58 = vector.broadcast %57 : vector<1x16xf32> to vector<2x16xf32>
    %59 = arith.addf %56, %58 : vector<2x16xf32>
    %cst_48 = arith.constant 0.000000e+00 : f32
    %60 = vector.broadcast %cst_48 : f32 to vector<2x16xf32>
    %61 = arith.maximumf %59, %60 : vector<2x16xf32>
    %c0_49 = arith.constant 0 : index
    %c0_50 = arith.constant 0 : index
    %62 = vector.load %arg11[%c0_49, %c0_50] : memref<16x4xf32, #tpu.memory_space<vmem>>, vector<16x4xf32>
    %cst_51 = arith.constant dense<0.000000e+00> : vector<2x4xf32>
    %63 = tpu.matmul %61, %62, %cst_51 {dimension_numbers = #tpu.dot_dimension_numbers<[1], [0], [0], [1], [0, 0, 1, 1], [], []>} : vector<2x16xf32>, vector<16x4xf32>, vector<2x4xf32> -> vector<2x4xf32>
    %c0_52 = arith.constant 0 : index
    %c0_53 = arith.constant 0 : index
    %64 = vector.load %arg12[%c0_52, %c0_53] : memref<1x4xf32, #tpu.memory_space<vmem>>, vector<1x4xf32>
    %65 = vector.broadcast %64 : vector<1x4xf32> to vector<2x4xf32>
    %66 = arith.addf %63, %65 : vector<2x4xf32>
    %cst_54 = arith.constant dense<0xFF800000> : vector<2xf32>
    %67 = vector.multi_reduction <maximumf>, %66, %cst_54 [1] : vector<2x4xf32> to vector<2xf32>
    %68 = vector.shape_cast %67 : vector<2xf32> to vector<2x1xf32>
    %69 = vector.broadcast %68 : vector<2x1xf32> to vector<2x4xf32>
    %70 = arith.subf %66, %69 : vector<2x4xf32>
    %71 = math.exp %70 : vector<2x4xf32>
    %cst_55 = arith.constant dense<0.000000e+00> : vector<2xf32>
    %72 = vector.multi_reduction <add>, %71, %cst_55 [1] : vector<2x4xf32> to vector<2xf32>
    %73 = vector.shape_cast %72 : vector<2xf32> to vector<2x1xf32>
    %74 = math.log %73 : vector<2x1xf32>
    %75 = arith.addf %74, %68 : vector<2x1xf32>
    %76 = vector.broadcast %75 : vector<2x1xf32> to vector<2x4xf32>
    %77 = arith.subf %66, %76 : vector<2x4xf32>
    %c0_56 = arith.constant 0 : index
    %c0_57 = arith.constant 0 : index
    %78 = vector.load %arg13[%c0_56, %c0_57] : memref<2x4xf32, #tpu.memory_space<vmem>>, vector<2x4xf32>
    tpu.vector_store %arg13[%c0_56, %c0_57], %77 {strides = array<i32>} : memref<2x4xf32, #tpu.memory_space<vmem>>, vector<2x4xf32>,
    return
  }
}

</mosaic_0001>

<llo_original>
// kernel: tpu_custom_call.1
$region0: #{tpu_custom_call.1}
  #allocation0 [shape = 'u32[]', space=smem, size = 0x4, offset = 0x4, fixed_abs, tag = 'smem constant byte address 0x4 - core index']
  #allocation1 [shape = 'u32[144,128]{1,0:T(1,128)}', space=vmem, size = 0x12000, scoped, tag = 'internal scratch']
  %s0 = inlined_call_operand.vmem [shape: f32[16,16], index: 0, kind: input, shape index: {}]
  %s1 = inlined_call_operand.vmem [shape: f32[16,16], index: 1, kind: input, shape index: {}]
  %s2 = inlined_call_operand.vmem [shape: f32[3,2,16], index: 2, kind: input, shape index: {}]
  %s3 = inlined_call_operand.vmem [shape: f32[16,32], index: 3, kind: input, shape index: {}]
  %s4 = inlined_call_operand.vmem [shape: f32[1,32], index: 4, kind: input, shape index: {}]
  %s5 = inlined_call_operand.vmem [shape: f32[2,32,32], index: 5, kind: input, shape index: {}]
  %s6 = inlined_call_operand.vmem [shape: f32[2,32], index: 6, kind: input, shape index: {}]
  %s7 = inlined_call_operand.vmem [shape: f32[96,32], index: 7, kind: input, shape index: {}]
  %s8 = inlined_call_operand.vmem [shape: f32[1,32], index: 8, kind: input, shape index: {}]
  %s9 = inlined_call_operand.vmem [shape: f32[32,16], index: 9, kind: input, shape index: {}]
  %s10 = inlined_call_operand.vmem [shape: f32[1,16], index: 10, kind: input, shape index: {}]
  %s11 = inlined_call_operand.vmem [shape: f32[16,4], index: 11, kind: input, shape index: {}]
  %s12 = inlined_call_operand.vmem [shape: f32[1,4], index: 12, kind: input, shape index: {}]
  %s13 = inlined_call_operand.hbm [shape: f32[2,4], index: 13, kind: output, shape index: {}]
  %s14 = sld [smem:[#allocation0]]
  $region62: #{tpu_custom_call.1} parent=0
    _
  %s16 = ssub.s32 1, %s14
  %s17 = scalar_select 0, %s16, %s14
  $region1: #{tpu_custom_call.1} parent=0
    #allocation2 [shape = 'u8[1024]{0}', space=vmem, size = 0x400, scoped, tag = 'output window, operand 0, single buffered']
    #allocation3 [shape = 's32[1]{0}', space=sflag, size = 0x4, scoped, tag = 'scoped memory for tpu_custom_call.1']
    %18 = vsyncpa [#allocation3], 0
    // Predicated region
    $region2: #{tpu_custom_call.1} parent=1 // pred_check
      _
    $region3: #{tpu_custom_call.1} parent=1 // pred_check_branch
      %20 = sbr.rel (0) target = $region5
    $region4: #{tpu_custom_call.1} parent=1 // pred_region
      _
    $region5: #{tpu_custom_call.1} parent=1 // pred_fallthru
      _
    // Predicated region
    $region6: #{tpu_custom_call.1} parent=1 // pred_check
      _
    $region7: #{tpu_custom_call.1} parent=1 // pred_check_branch
      %22 = sbr.rel (0) target = $region9
    $region8: #{tpu_custom_call.1} parent=1 // pred_region
      _
    $region9: #{tpu_custom_call.1} parent=1 // pred_fallthru
      _
    // Predicated region
    $region10: #{tpu_custom_call.1} parent=1 // pred_check
      _
    $region11: #{tpu_custom_call.1} parent=1 // pred_check_branch
      %24 = sbr.rel (0) target = $region13
    $region12: #{tpu_custom_call.1} parent=1 // pred_region
      _
    $region13: #{tpu_custom_call.1} parent=1 // pred_fallthru
      _
    // Predicated region
    $region14: #{tpu_custom_call.1} parent=1 // pred_check
      _
    $region15: #{tpu_custom_call.1} parent=1 // pred_check_branch
      %26 = sbr.rel (0) target = $region17
    $region16: #{tpu_custom_call.1} parent=1 // pred_region
      _
    $region17: #{tpu_custom_call.1} parent=1 // pred_fallthru
      _
    // Predicated region
    $region18: #{tpu_custom_call.1} parent=1 // pred_check
      _
    $region19: #{tpu_custom_call.1} parent=1 // pred_check_branch
      %28 = sbr.rel (0) target = $region21
    $region20: #{tpu_custom_call.1} parent=1 // pred_region
      _
    $region21: #{tpu_custom_call.1} parent=1 // pred_fallthru
      _
    // Predicated region
    $region22: #{tpu_custom_call.1} parent=1 // pred_check
      _
    $region23: #{tpu_custom_call.1} parent=1 // pred_check_branch
      %30 = sbr.rel (0) target = $region25
    $region24: #{tpu_custom_call.1} parent=1 // pred_region
      _
    $region25: #{tpu_custom_call.1} parent=1 // pred_fallthru
      _
    // Predicated region
    $region26: #{tpu_custom_call.1} parent=1 // pred_check
      _
    $region27: #{tpu_custom_call.1} parent=1 // pred_check_branch
      %32 = sbr.rel (0) target = $region29
    $region28: #{tpu_custom_call.1} parent=1 // pred_region
      _
    $region29: #{tpu_custom_call.1} parent=1 // pred_fallthru
      _
    // Predicated region
    $region30: #{tpu_custom_call.1} parent=1 // pred_check
      _
    $region31: #{tpu_custom_call.1} parent=1 // pred_check_branch
      %34 = sbr.rel (0) target = $region33
    $region32: #{tpu_custom_call.1} parent=1 // pred_region
      _
    $region33: #{tpu_custom_call.1} parent=1 // pred_fallthru
      _
    // Predicated region
    $region34: #{tpu_custom_call.1} parent=1 // pred_check
      _
    $region35: #{tpu_custom_call.1} parent=1 // pred_check_branch
      %36 = sbr.rel (0) target = $region37
    $region36: #{tpu_custom_call.1} parent=1 // pred_region
      _
    $region37: #{tpu_custom_call.1} parent=1 // pred_fallthru
      _
    // Predicated region
    $region38: #{tpu_custom_call.1} parent=1 // pred_check
      _
    $region39: #{tpu_custom_call.1} parent=1 // pred_check_branch
      %38 = sbr.rel (0) target = $region41
    $region40: #{tpu_custom_call.1} parent=1 // pred_region
      _
    $region41: #{tpu_custom_call.1} parent=1 // pred_fallthru
      _
    // Predicated region
    $region42: #{tpu_custom_call.1} parent=1 // pred_check
      _
    $region43: #{tpu_custom_call.1} parent=1 // pred_check_branch
      %40 = sbr.rel (0) target = $region45
    $region44: #{tpu_custom_call.1} parent=1 // pred_region
      _
    $region45: #{tpu_custom_call.1} parent=1 // pred_fallthru
      _
    // Predicated region
    $region46: #{tpu_custom_call.1} parent=1 // pred_check
      _
    $region47: #{tpu_custom_call.1} parent=1 // pred_check_branch
      %42 = sbr.rel (0) target = $region49
    $region48: #{tpu_custom_call.1} parent=1 // pred_region
      _
    $region49: #{tpu_custom_call.1} parent=1 // pred_fallthru
      _
    // Predicated region
    $region50: #{tpu_custom_call.1} parent=1 // pred_check
      _
    $region51: #{tpu_custom_call.1} parent=1 // pred_check_branch
      %44 = sbr.rel (0) target = $region53
    $region52: #{tpu_custom_call.1} parent=1 // pred_region
      _
    $region53: #{tpu_custom_call.1} parent=1 // pred_fallthru
      _
    %v45 = vld [vmem:[%s0] sm:$0xff]
    %v46 = vld [vmem:[%s0 + $0x8] sm:$0xff]
    %v47 = vld [vmem:[%s1] sm:$0xff]
    %v48 = vld [vmem:[%s1 + $0x8] sm:$0xff]
    %vm49 = vcmask 130048
    %v51 = vsel %vm49, %v45, 0
    %v54 = vsel %vm49, %v46, 0
    %56 = vmatprep.subr.mxu0 0.0
    %57 = vmatpush1.msra.mxu0 %v47
    %58 = vmatprep.subr.mxu0 0.0
    %59 = vmatpush1.msra.mxu0 %v48
    %60 = vmatprep.subr.mxu0 0.0
    %61 = vmatpush1.msra.mxu0 0.0
    %62 = vmatprep.subr.mxu0 0.0
    %63 = vmatpush1.msra.mxu0 0.0
    %64 = vmatprep.subr.mxu0 0.0
    %65 = vmatpush1.msra.mxu0 0.0
    %66 = vmatprep.subr.mxu0 0.0
    %67 = vmatpush1.msra.mxu0 0.0
    %68 = vmatprep.subr.mxu0 0.0
    %69 = vmatpush1.msra.mxu0 0.0
    %70 = vmatprep.subr.mxu0 0.0
    %71 = vmatpush1.msra.mxu0 0.0
    %72 = vmatprep.subr.mxu0 0.0
    %73 = vmatpush1.msra.mxu0 0.0
    %74 = vmatprep.subr.mxu0 0.0
    %75 = vmatpush1.msra.mxu0 0.0
    %76 = vmatprep.subr.mxu0 0.0
    %77 = vmatpush1.msra.mxu0 0.0
    %78 = vmatprep.subr.mxu0 0.0
    %79 = vmatpush1.msra.mxu0 0.0
    %80 = vmatprep.subr.mxu0 0.0
    %81 = vmatpush1.msra.mxu0 0.0
    %82 = vmatprep.subr.mxu0 0.0
    %83 = vmatpush1.msra.mxu0 0.0
    %84 = vmatprep.subr.mxu0 0.0
    %85 = vmatpush1.msra.mxu0 0.0
    %86 = vmatprep.subr.mxu0 0.0
    %87 = vmatpush1.msra.mxu0 0.0
    %88 = vmatprep.subr.mxu0 0.0
    %89 = vmatpush1.msra.mxu0 0.0
    %90 = vmatprep.subr.mxu0 0.0
    %91 = vmatpush1.msra.mxu0 0.0
    %92 = vmatprep.subr.mxu0 0.0
    %93 = vmatpush1.msra.mxu0 0.0
    %94 = vmatprep.subr.mxu0 0.0
    %95 = vmatpush1.msra.mxu0 0.0
    %96 = vmatprep.subr.mxu0 0.0
    %97 = vmatpush1.msra.mxu0 0.0
    %98 = vmatprep.subr.mxu0 0.0
    %99 = vmatpush1.msra.mxu0 0.0
    %100 = vmatprep.subr.mxu0 0.0
    %101 = vmatpush1.msra.mxu0 0.0
    %102 = vmatprep.subr.mxu0 0.0
    %103 = vmatpush1.msra.mxu0 0.0
    %104 = vmatprep.subr.mxu0 0.0
    %105 = vmatpush1.msra.mxu0 0.0
    %106 = vmatprep.subr.mxu0 0.0
    %107 = vmatpush1.msra.mxu0 0.0
    %108 = vmatprep.subr.mxu0 0.0
    %109 = vmatpush1.msra.mxu0 0.0
    %110 = vmatprep.subr.mxu0 0.0
    %111 = vmatpush1.msra.mxu0 0.0
    %112 = vmatprep.subr.mxu0 0.0
    %113 = vmatpush1.msra.mxu0 0.0
    %114 = vmatprep.subr.mxu0 0.0
    %115 = vmatpush1.msra.mxu0 0.0
    %116 = vmatprep.subr.mxu0 0.0
    %117 = vmatpush1.msra.mxu0 0.0
    %118 = vmatprep.subr.mxu0 0.0
    %119 = vmatpush1.msra.mxu0 0.0
    %120 = vmatprep.mubr.f32.mxu0 0.0
    %121 = vmatmul.mubr.f32.gmra.mrb[0].mxu0 %v51
    %v122 = vpop.f32.mrb[0].mxu0
    %v123 = vadd.f32 0.0, %v122
    %v124 = vpop.f32.mrb[0].mxu0
    %125 = vmatprep.mubr.f32.mxu0 0.0
    %126 = vmatmul.mubr.f32.gmra.mrb[0].mxu0 %v54
    %v127 = vpop.f32.mrb[0].mxu0
    %v128 = vadd.f32 0.0, %v127
    %v129 = vpop.f32.mrb[0].mxu0
    %130 = vdwg.mxu0
    %v131 = vld [vmem:[%s3] sm:$0xff]
    %v132 = vld [vmem:[%s3 + $0x8] sm:$0xff]
    %v133 = vld [vmem:[%s4] sm:$0x1]
    %v135 = vlaneseq
    %v136 = vshrl.u32 %v135, 7
    %v137 = vsub.s32 0, %v136
    %v138 = vrot.slane %v133, %v137
    %v141 = vsel %vm49, %v123, 0
    %v144 = vsel %vm49, %v128, 0
    %146 = vmatprep.subr.mxu0 0.0
    %147 = vmatpush1.msra.mxu0 %v131
    %148 = vmatprep.subr.mxu0 0.0
    %149 = vmatpush1.msra.mxu0 %v132
    %150 = vmatprep.subr.mxu0 0.0
    %151 = vmatpush1.msra.mxu0 0.0
    %152 = vmatprep.subr.mxu0 0.0
    %153 = vmatpush1.msra.mxu0 0.0
    %154 = vmatprep.subr.mxu0 0.0
    %155 = vmatpush1.msra.mxu0 0.0
    %156 = vmatprep.subr.mxu0 0.0
    %157 = vmatpush1.msra.mxu0 0.0
    %158 = vmatprep.subr.mxu0 0.0
    %159 = vmatpush1.msra.mxu0 0.0
    %160 = vmatprep.subr.mxu0 0.0
    %161 = vmatpush1.msra.mxu0 0.0
    %162 = vmatprep.subr.mxu0 0.0
    %163 = vmatpush1.msra.mxu0 0.0
    %164 = vmatprep.subr.mxu0 0.0
    %165 = vmatpush1.msra.mxu0 0.0
    %166 = vmatprep.subr.mxu0 0.0
    %167 = vmatpush1.msra.mxu0 0.0
    %168 = vmatprep.subr.mxu0 0.0
    %169 = vmatpush1.msra.mxu0 0.0
    %170 = vmatprep.subr.mxu0 0.0
    %171 = vmatpush1.msra.mxu0 0.0
    %172 = vmatprep.subr.mxu0 0.0
    %173 = vmatpush1.msra.mxu0 0.0
    %174 = vmatprep.subr.mxu0 0.0
    %175 = vmatpush1.msra.mxu0 0.0
    %176 = vmatprep.subr.mxu0 0.0
    %177 = vmatpush1.msra.mxu0 0.0
    %178 = vmatprep.subr.mxu0 0.0
    %179 = vmatpush1.msra.mxu0 0.0
    %180 = vmatprep.subr.mxu0 0.0
    %181 = vmatpush1.msra.mxu0 0.0
    %182 = vmatprep.subr.mxu0 0.0
    %183 = vmatpush1.msra.mxu0 0.0
    %184 = vmatprep.subr.mxu0 0.0
    %185 = vmatpush1.msra.mxu0 0.0
    %186 = vmatprep.subr.mxu0 0.0
    %187 = vmatpush1.msra.mxu0 0.0
    %188 = vmatprep.subr.mxu0 0.0
    %189 = vmatpush1.msra.mxu0 0.0
    %190 = vmatprep.subr.mxu0 0.0
    %191 = vmatpush1.msra.mxu0 0.0
    %192 = vmatprep.subr.mxu0 0.0
    %193 = vmatpush1.msra.mxu0 0.0
    %194 = vmatprep.subr.mxu0 0.0
    %195 = vmatpush1.msra.mxu0 0.0
    %196 = vmatprep.subr.mxu0 0.0
    %197 = vmatpush1.msra.mxu0 0.0
    %198 = vmatprep.subr.mxu0 0.0
    %199 = vmatpush1.msra.mxu0 0.0
    %200 = vmatprep.subr.mxu0 0.0
    %201 = vmatpush1.msra.mxu0 0.0
    %202 = vmatprep.subr.mxu0 0.0
    %203 = vmatpush1.msra.mxu0 0.0
    %204 = vmatprep.subr.mxu0 0.0
    %205 = vmatpush1.msra.mxu0 0.0
    %206 = vmatprep.subr.mxu0 0.0
    %207 = vmatpush1.msra.mxu0 0.0
    %208 = vmatprep.subr.mxu0 0.0
    %209 = vmatpush1.msra.mxu0 0.0
    %210 = vmatprep.mubr.f32.mxu0 0.0
    %211 = vmatmul.mubr.f32.gmra.mrb[0].mxu0 %v141
    %v212 = vpop.f32.mrb[0].mxu0
    %v213 = vadd.f32 %v138, %v212
    %v214 = vpop.f32.mrb[0].mxu0
    %215 = vmatprep.mubr.f32.mxu0 0.0
    %216 = vmatmul.mubr.f32.gmra.mrb[0].mxu0 %v144
    %v217 = vpop.f32.mrb[0].mxu0
    %v218 = vadd.f32 %v138, %v217
    %v219 = vpop.f32.mrb[0].mxu0
    %220 = vdwg.mxu0
    %v221 = vmax.f32 %v213, 0.0
    %v222 = vmax.f32 %v218, 0.0
    %v223 = vld [vmem:[%s5] sm:$0xff]
    %v224 = vld [vmem:[%s5 + $0x8] sm:$0xff]
    %v225 = vld [vmem:[%s5 + $0x10] sm:$0xff]
    %v226 = vld [vmem:[%s5 + $0x18] sm:$0xff]
    %vm227 = vcmask 261120
    %v229 = vsel %vm227, %v221, 0
    %v232 = vsel %vm227, %v222, 0
    %234 = vmatprep.subr.mxu0 0.0
    %235 = vmatpush1.msra.mxu0 %v223
    %236 = vmatprep.subr.mxu0 0.0
    %237 = vmatpush1.msra.mxu0 %v224
    %238 = vmatprep.subr.mxu0 0.0
    %239 = vmatpush1.msra.mxu0 %v225
    %240 = vmatprep.subr.mxu0 0.0
    %241 = vmatpush1.msra.mxu0 %v226
    %242 = vmatprep.subr.mxu0 0.0
    %243 = vmatpush1.msra.mxu0 0.0
    %244 = vmatprep.subr.mxu0 0.0
    %245 = vmatpush1.msra.mxu0 0.0
    %246 = vmatprep.subr.mxu0 0.0
    %247 = vmatpush1.msra.mxu0 0.0
    %248 = vmatprep.subr.mxu0 0.0
    %249 = vmatpush1.msra.mxu0 0.0
    %250 = vmatprep.subr.mxu0 0.0
    %251 = vmatpush1.msra.mxu0 0.0
    %252 = vmatprep.subr.mxu0 0.0
    %253 = vmatpush1.msra.mxu0 0.0
    %254 = vmatprep.subr.mxu0 0.0
    %255 = vmatpush1.msra.mxu0 0.0
    %256 = vmatprep.subr.mxu0 0.0
    %257 = vmatpush1.msra.mxu0 0.0
    %258 = vmatprep.subr.mxu0 0.0
    %259 = vmatpush1.msra.mxu0 0.0
    %260 = vmatprep.subr.mxu0 0.0
    %261 = vmatpush1.msra.mxu0 0.0
    %262 = vmatprep.subr.mxu0 0.0
    %263 = vmatpush1.msra.mxu0 0.0
    %264 = vmatprep.subr.mxu0 0.0
    %265 = vmatpush1.msra.mxu0 0.0
    %266 = vmatprep.subr.mxu0 0.0
    %267 = vmatpush1.msra.mxu0 0.0
    %268 = vmatprep.subr.mxu0 0.0
    %269 = vmatpush1.msra.mxu0 0.0
    %270 = vmatprep.subr.mxu0 0.0
    %271 = vmatpush1.msra.mxu0 0.0
    %272 = vmatprep.subr.mxu0 0.0
    %273 = vmatpush1.msra.mxu0 0.0
    %274 = vmatprep.subr.mxu0 0.0
    %275 = vmatpush1.msra.mxu0 0.0
    %276 = vmatprep.subr.mxu0 0.0
    %277 = vmatpush1.msra.mxu0 0.0
    %278 = vmatprep.subr.mxu0 0.0
    %279 = vmatpush1.msra.mxu0 0.0
    %280 = vmatprep.subr.mxu0 0.0
    %281 = vmatpush1.msra.mxu0 0.0
    %282 = vmatprep.subr.mxu0 0.0
    %283 = vmatpush1.msra.mxu0 0.0
    %284 = vmatprep.subr.mxu0 0.0
    %285 = vmatpush1.msra.mxu0 0.0
    %286 = vmatprep.subr.mxu0 0.0
    %287 = vmatpush1.msra.mxu0 0.0
    %288 = vmatprep.subr.mxu0 0.0
    %289 = vmatpush1.msra.mxu0 0.0
    %290 = vmatprep.subr.mxu0 0.0
    %291 = vmatpush1.msra.mxu0 0.0
    %292 = vmatprep.subr.mxu0 0.0
    %293 = vmatpush1.msra.mxu0 0.0
    %294 = vmatprep.subr.mxu0 0.0
    %295 = vmatpush1.msra.mxu0 0.0
    %296 = vmatprep.subr.mxu0 0.0
    %297 = vmatpush1.msra.mxu0 0.0
    %298 = vmatprep.mubr.f32.mxu0 0.0
    %299 = vmatmul.mubr.f32.gmra.mrb[0].mxu0 %v229
    %v300 = vpop.f32.mrb[0].mxu0
    %v301 = vadd.f32 0.0, %v300
    %v302 = vpop.f32.mrb[0].mxu0
    %303 = vmatprep.mubr.f32.mxu0 0.0
    %304 = vmatmul.mubr.f32.gmra.mrb[0].mxu0 %v232
    %v305 = vpop.f32.mrb[0].mxu0
    %v306 = vadd.f32 0.0, %v305
    %v307 = vpop.f32.mrb[0].mxu0
    %308 = vdwg.mxu0
    %v309 = vld [vmem:[%s6] sm:$0x1]
    %v310 = vlaneseq
    %v311 = vshrl.u32 %v310, 7
    %v312 = vsub.s32 0, %v311
    %v313 = vrot.slane %v309, %v312
    %314 = vmatprep.subr.mxu0 0.0
    %315 = vmatpush1.msra.mxu0 %v301
    %316 = vmatprep.subr.mxu0 0.0
    %317 = vmatpush1.msra.mxu0 %v306
    %318 = vmatprep.subr.mxu0 0.0
    %319 = vmatpush1.msra.mxu0 0.0
    %320 = vmatprep.subr.mxu0 0.0
    %321 = vmatpush1.msra.mxu0 0.0
    %322 = vmatprep.subr.mxu0 0.0
    %323 = vmatpush1.msra.mxu0 0.0
    %324 = vmatprep.subr.mxu0 0.0
    %325 = vmatpush1.msra.mxu0 0.0
    %326 = vmatprep.subr.mxu0 0.0
    %327 = vmatpush1.msra.mxu0 0.0
    %328 = vmatprep.subr.mxu0 0.0
    %329 = vmatpush1.msra.mxu0 0.0
    %330 = vmatprep.subr.mxu0 0.0
    %331 = vmatpush1.msra.mxu0 0.0
    %332 = vmatprep.subr.mxu0 0.0
    %333 = vmatpush1.msra.mxu0 0.0
    %334 = vmatprep.subr.mxu0 0.0
    %335 = vmatpush1.msra.mxu0 0.0
    %336 = vmatprep.subr.mxu0 0.0
    %337 = vmatpush1.msra.mxu0 0.0
    %338 = vmatprep.subr.mxu0 0.0
    %339 = vmatpush1.msra.mxu0 0.0
    %340 = vmatprep.subr.mxu0 0.0
    %341 = vmatpush1.msra.mxu0 0.0
    %342 = vmatprep.subr.mxu0 0.0
    %343 = vmatpush1.msra.mxu0 0.0
    %344 = vmatprep.subr.mxu0 0.0
    %345 = vmatpush1.msra.mxu0 0.0
    %346 = vmatprep.subr.mxu0 0.0
    %347 = vmatpush1.msra.mxu0 0.0
    %348 = vmatprep.subr.mxu0 0.0
    %349 = vmatpush1.msra.mxu0 0.0
    %350 = vmatprep.subr.mxu0 0.0
    %351 = vmatpush1.msra.mxu0 0.0
    %352 = vmatprep.subr.mxu0 0.0
    %353 = vmatpush1.msra.mxu0 0.0
    %354 = vmatprep.subr.mxu0 0.0
    %355 = vmatpush1.msra.mxu0 0.0
    %356 = vmatprep.subr.mxu0 0.0
    %357 = vmatpush1.msra.mxu0 0.0
    %358 = vmatprep.subr.mxu0 0.0
    %359 = vmatpush1.msra.mxu0 0.0
    %360 = vmatprep.subr.mxu0 0.0
    %361 = vmatpush1.msra.mxu0 0.0
    %362 = vmatprep.subr.mxu0 0.0
    %363 = vmatpush1.msra.mxu0 0.0
    %364 = vmatprep.subr.mxu0 0.0
    %365 = vmatpush1.msra.mxu0 0.0
    %366 = vmatprep.subr.mxu0 0.0
    %367 = vmatpush1.msra.mxu0 0.0
    %368 = vmatprep.subr.mxu0 0.0
    %369 = vmatpush1.msra.mxu0 0.0
    %370 = vmatprep.subr.mxu0 0.0
    %371 = vmatpush1.msra.mxu0 0.0
    %372 = vmatprep.subr.mxu0 0.0
    %373 = vmatpush1.msra.mxu0 0.0
    %374 = vmatprep.subr.mxu0 0.0
    %375 = vmatpush1.msra.mxu0 0.0
    %376 = vmatprep.subr.mxu0 0.0
    %377 = vmatpush1.msra.mxu0 0.0
    %378 = vmatprep.mubr.f32.mxu0 0.0
    %379 = vmatmul.mubr.f32.gmra.mrb[0].mxu0 %v51
    %v380 = vpop.f32.mrb[0].mxu0
    %v381 = vadd.f32 %v313, %v380
    %v382 = vpop.f32.mrb[0].mxu0
    %383 = vmatprep.mubr.f32.mxu0 0.0
    %384 = vmatmul.mubr.f32.gmra.mrb[0].mxu0 %v54
    %v385 = vpop.f32.mrb[0].mxu0
    %v386 = vadd.f32 %v313, %v385
    %v387 = vpop.f32.mrb[0].mxu0
    %388 = vdwg.mxu0
    %v389 = vmax.f32 %v381, 0.0
    %v390 = vmax.f32 %v386, 0.0
    %s391 = scalar_lea.vmem %s5, 32
    %v392 = vld [vmem:[%s391] sm:$0xff]
    %v393 = vld [vmem:[%s391 + $0x8] sm:$0xff]
    %v394 = vld [vmem:[%s391 + $0x10] sm:$0xff]
    %v395 = vld [vmem:[%s391 + $0x18] sm:$0xff]
    %v397 = vsel %vm227, %v389, 0
    %v400 = vsel %vm227, %v390, 0
    %402 = vmatprep.subr.mxu0 0.0
    %403 = vmatpush1.msra.mxu0 %v392
    %404 = vmatprep.subr.mxu0 0.0
    %405 = vmatpush1.msra.mxu0 %v393
    %406 = vmatprep.subr.mxu0 0.0
    %407 = vmatpush1.msra.mxu0 %v394
    %408 = vmatprep.subr.mxu0 0.0
    %409 = vmatpush1.msra.mxu0 %v395
    %410 = vmatprep.subr.mxu0 0.0
    %411 = vmatpush1.msra.mxu0 0.0
    %412 = vmatprep.subr.mxu0 0.0
    %413 = vmatpush1.msra.mxu0 0.0
    %414 = vmatprep.subr.mxu0 0.0
    %415 = vmatpush1.msra.mxu0 0.0
    %416 = vmatprep.subr.mxu0 0.0
    %417 = vmatpush1.msra.mxu0 0.0
    %418 = vmatprep.subr.mxu0 0.0
    %419 = vmatpush1.msra.mxu0 0.0
    %420 = vmatprep.subr.mxu0 0.0
    %421 = vmatpush1.msra.mxu0 0.0
    %422 = vmatprep.subr.mxu0 0.0
    %423 = vmatpush1.msra.mxu0 0.0
    %424 = vmatprep.subr.mxu0 0.0
    %425 = vmatpush1.msra.mxu0 0.0
    %426 = vmatprep.subr.mxu0 0.0
    %427 = vmatpush1.msra.mxu0 0.0
    %428 = vmatprep.subr.mxu0 0.0
    %429 = vmatpush1.msra.mxu0 0.0
    %430 = vmatprep.subr.mxu0 0.0
    %431 = vmatpush1.msra.mxu0 0.0
    %432 = vmatprep.subr.mxu0 0.0
    %433 = vmatpush1.msra.mxu0 0.0
    %434 = vmatprep.subr.mxu0 0.0
    %435 = vmatpush1.msra.mxu0 0.0
    %436 = vmatprep.subr.mxu0 0.0
    %437 = vmatpush1.msra.mxu0 0.0
    %438 = vmatprep.subr.mxu0 0.0
    %439 = vmatpush1.msra.mxu0 0.0
    %440 = vmatprep.subr.mxu0 0.0
    %441 = vmatpush1.msra.mxu0 0.0
    %442 = vmatprep.subr.mxu0 0.0
    %443 = vmatpush1.msra.mxu0 0.0
    %444 = vmatprep.subr.mxu0 0.0
    %445 = vmatpush1.msra.mxu0 0.0
    %446 = vmatprep.subr.mxu0 0.0
    %447 = vmatpush1.msra.mxu0 0.0
    %448 = vmatprep.subr.mxu0 0.0
    %449 = vmatpush1.msra.mxu0 0.0
    %450 = vmatprep.subr.mxu0 0.0
    %451 = vmatpush1.msra.mxu0 0.0
    %452 = vmatprep.subr.mxu0 0.0
    %453 = vmatpush1.msra.mxu0 0.0
    %454 = vmatprep.subr.mxu0 0.0
    %455 = vmatpush1.msra.mxu0 0.0
    %456 = vmatprep.subr.mxu0 0.0
    %457 = vmatpush1.msra.mxu0 0.0
    %458 = vmatprep.subr.mxu0 0.0
    %459 = vmatpush1.msra.mxu0 0.0
    %460 = vmatprep.subr.mxu0 0.0
    %461 = vmatpush1.msra.mxu0 0.0
    %462 = vmatprep.subr.mxu0 0.0
    %463 = vmatpush1.msra.mxu0 0.0
    %464 = vmatprep.subr.mxu0 0.0
    %465 = vmatpush1.msra.mxu0 0.0
    %466 = vmatprep.mubr.f32.mxu0 0.0
    %467 = vmatmul.mubr.f32.gmra.mrb[0].mxu0 %v397
    %v468 = vpop.f32.mrb[0].mxu0
    %v469 = vadd.f32 0.0, %v468
    %v470 = vpop.f32.mrb[0].mxu0
    %471 = vmatprep.mubr.f32.mxu0 0.0
    %472 = vmatmul.mubr.f32.gmra.mrb[0].mxu0 %v400
    %v473 = vpop.f32.mrb[0].mxu0
    %v474 = vadd.f32 0.0, %v473
    %v475 = vpop.f32.mrb[0].mxu0
    %476 = vdwg.mxu0
    %v477 = vld [vmem:[%s6 + $0x1] sm:$0x1]
    %v478 = vlaneseq
    %v479 = vshrl.u32 %v478, 7
    %v480 = vsub.s32 0, %v479
    %v481 = vrot.slane %v477, %v480
    %482 = vmatprep.subr.mxu0 0.0
    %483 = vmatpush1.msra.mxu0 %v469
    %484 = vmatprep.subr.mxu0 0.0
    %485 = vmatpush1.msra.mxu0 %v474
    %486 = vmatprep.subr.mxu0 0.0
    %487 = vmatpush1.msra.mxu0 0.0
    %488 = vmatprep.subr.mxu0 0.0
    %489 = vmatpush1.msra.mxu0 0.0
    %490 = vmatprep.subr.mxu0 0.0
    %491 = vmatpush1.msra.mxu0 0.0
    %492 = vmatprep.subr.mxu0 0.0
    %493 = vmatpush1.msra.mxu0 0.0
    %494 = vmatprep.subr.mxu0 0.0
    %495 = vmatpush1.msra.mxu0 0.0
    %496 = vmatprep.subr.mxu0 0.0
    %497 = vmatpush1.msra.mxu0 0.0
    %498 = vmatprep.subr.mxu0 0.0
    %499 = vmatpush1.msra.mxu0 0.0
    %500 = vmatprep.subr.mxu0 0.0
    %501 = vmatpush1.msra.mxu0 0.0
    %502 = vmatprep.subr.mxu0 0.0
    %503 = vmatpush1.msra.mxu0 0.0
    %504 = vmatprep.subr.mxu0 0.0
    %505 = vmatpush1.msra.mxu0 0.0
    %506 = vmatprep.subr.mxu0 0.0
    %507 = vmatpush1.msra.mxu0 0.0
    %508 = vmatprep.subr.mxu0 0.0
    %509 = vmatpush1.msra.mxu0 0.0
    %510 = vmatprep.subr.mxu0 0.0
    %511 = vmatpush1.msra.mxu0 0.0
    %512 = vmatprep.subr.mxu0 0.0
    %513 = vmatpush1.msra.mxu0 0.0
    %514 = vmatprep.subr.mxu0 0.0
    %515 = vmatpush1.msra.mxu0 0.0
    %516 = vmatprep.subr.mxu0 0.0
    %517 = vmatpush1.msra.mxu0 0.0
    %518 = vmatprep.subr.mxu0 0.0
    %519 = vmatpush1.msra.mxu0 0.0
    %520 = vmatprep.subr.mxu0 0.0
    %521 = vmatpush1.msra.mxu0 0.0
    %522 = vmatprep.subr.mxu0 0.0
    %523 = vmatpush1.msra.mxu0 0.0
    %524 = vmatprep.subr.mxu0 0.0
    %525 = vmatpush1.msra.mxu0 0.0
    %526 = vmatprep.subr.mxu0 0.0
    %527 = vmatpush1.msra.mxu0 0.0
    %528 = vmatprep.subr.mxu0 0.0
    %529 = vmatpush1.msra.mxu0 0.0
    %530 = vmatprep.subr.mxu0 0.0
    %531 = vmatpush1.msra.mxu0 0.0
    %532 = vmatprep.subr.mxu0 0.0
    %533 = vmatpush1.msra.mxu0 0.0
    %534 = vmatprep.subr.mxu0 0.0
    %535 = vmatpush1.msra.mxu0 0.0
    %536 = vmatprep.subr.mxu0 0.0
    %537 = vmatpush1.msra.mxu0 0.0
    %538 = vmatprep.subr.mxu0 0.0
    %539 = vmatpush1.msra.mxu0 0.0
    %540 = vmatprep.subr.mxu0 0.0
    %541 = vmatpush1.msra.mxu0 0.0
    %542 = vmatprep.subr.mxu0 0.0
    %543 = vmatpush1.msra.mxu0 0.0
    %544 = vmatprep.subr.mxu0 0.0
    %545 = vmatpush1.msra.mxu0 0.0
    %546 = vmatprep.mubr.f32.mxu0 0.0
    %547 = vmatmul.mubr.f32.gmra.mrb[0].mxu0 %v51
    %v548 = vpop.f32.mrb[0].mxu0
    %v549 = vadd.f32 %v481, %v548
    %v550 = vpop.f32.mrb[0].mxu0
    %551 = vmatprep.mubr.f32.mxu0 0.0
    %552 = vmatmul.mubr.f32.gmra.mrb[0].mxu0 %v54
    %v553 = vpop.f32.mrb[0].mxu0
    %v554 = vadd.f32 %v481, %v553
    %v555 = vpop.f32.mrb[0].mxu0
    %556 = vdwg.mxu0
    %v557 = vmax.f32 %v549, 0.0
    %v558 = vmax.f32 %v554, 0.0
    %v559 = vld [vmem:[%s7] sm:$0xff]
    %v560 = vld [vmem:[%s7 + $0x8] sm:$0xff]
    %v561 = vld [vmem:[%s7 + $0x10] sm:$0xff]
    %v562 = vld [vmem:[%s7 + $0x18] sm:$0xff]
    %v563 = vld [vmem:[%s7 + $0x20] sm:$0xff]
    %v564 = vld [vmem:[%s7 + $0x28] sm:$0xff]
    %v565 = vld [vmem:[%s7 + $0x30] sm:$0xff]
    %v566 = vld [vmem:[%s7 + $0x38] sm:$0xff]
    %v567 = vld [vmem:[%s7 + $0x40] sm:$0xff]
    %v568 = vld [vmem:[%s7 + $0x48] sm:$0xff]
    %v569 = vld [vmem:[%s7 + $0x50] sm:$0xff]
    %v570 = vld [vmem:[%s7 + $0x58] sm:$0xff]
    %v571 = vld [vmem:[%s2] sm:$0x3]
    %v573 = vsel %vm49, %v571, 0
    %575 = vmatprep.subr.mxu0 0.0
    %576 = vmatpush1.msra.mxu0 %v557
    %577 = vmatprep.subr.mxu0 0.0
    %578 = vmatpush1.msra.mxu0 %v558
    %579 = vmatprep.subr.mxu0 0.0
    %580 = vmatpush1.msra.mxu0 0.0
    %581 = vmatprep.subr.mxu0 0.0
    %582 = vmatpush1.msra.mxu0 0.0
    %583 = vmatprep.subr.mxu0 0.0
    %584 = vmatpush1.msra.mxu0 0.0
    %585 = vmatprep.subr.mxu0 0.0
    %586 = vmatpush1.msra.mxu0 0.0
    %587 = vmatprep.subr.mxu0 0.0
    %588 = vmatpush1.msra.mxu0 0.0
    %589 = vmatprep.subr.mxu0 0.0
    %590 = vmatpush1.msra.mxu0 0.0
    %591 = vmatprep.subr.mxu0 0.0
    %592 = vmatpush1.msra.mxu0 0.0
    %593 = vmatprep.subr.mxu0 0.0
    %594 = vmatpush1.msra.mxu0 0.0
    %595 = vmatprep.subr.mxu0 0.0
    %596 = vmatpush1.msra.mxu0 0.0
    %597 = vmatprep.subr.mxu0 0.0
    %598 = vmatpush1.msra.mxu0 0.0
    %599 = vmatprep.subr.mxu0 0.0
    %600 = vmatpush1.msra.mxu0 0.0
    %601 = vmatprep.subr.mxu0 0.0
    %602 = vmatpush1.msra.mxu0 0.0
    %603 = vmatprep.subr.mxu0 0.0
    %604 = vmatpush1.msra.mxu0 0.0
    %605 = vmatprep.subr.mxu0 0.0
    %606 = vmatpush1.msra.mxu0 0.0
    %607 = vmatprep.subr.mxu0 0.0
    %608 = vmatpush1.msra.mxu0 0.0
    %609 = vmatprep.subr.mxu0 0.0
    %610 = vmatpush1.msra.mxu0 0.0
    %611 = vmatprep.subr.mxu0 0.0
    %612 = vmatpush1.msra.mxu0 0.0
    %613 = vmatprep.subr.mxu0 0.0
    %614 = vmatpush1.msra.mxu0 0.0
    %615 = vmatprep.subr.mxu0 0.0
    %616 = vmatpush1.msra.mxu0 0.0
    %617 = vmatprep.subr.mxu0 0.0
    %618 = vmatpush1.msra.mxu0 0.0
    %619 = vmatprep.subr.mxu0 0.0
    %620 = vmatpush1.msra.mxu0 0.0
    %621 = vmatprep.subr.mxu0 0.0
    %622 = vmatpush1.msra.mxu0 0.0
    %623 = vmatprep.subr.mxu0 0.0
    %624 = vmatpush1.msra.mxu0 0.0
    %625 = vmatprep.subr.mxu0 0.0
    %626 = vmatpush1.msra.mxu0 0.0
    %627 = vmatprep.subr.mxu0 0.0
    %628 = vmatpush1.msra.mxu0 0.0
    %629 = vmatprep.subr.mxu0 0.0
    %630 = vmatpush1.msra.mxu0 0.0
    %631 = vmatprep.subr.mxu0 0.0
    %632 = vmatpush1.msra.mxu0 0.0
    %633 = vmatprep.subr.mxu0 0.0
    %634 = vmatpush1.msra.mxu0 0.0
    %635 = vmatprep.subr.mxu0 0.0
    %636 = vmatpush1.msra.mxu0 0.0
    %637 = vmatprep.subr.mxu0 0.0
    %638 = vmatpush1.msra.mxu0 0.0
    %639 = vmatprep.mubr.f32.mxu0 0.0
    %640 = vmatmul.mubr.f32.gmra.mrb[0].mxu0 %v573
    %v641 = vpop.f32.mrb[0].mxu0
    %v642 = vadd.f32 0.0, %v641
    %v643 = vpop.f32.mrb[0].mxu0
    %644 = vdwg.mxu0
    %s645 = scalar_lea.vmem %s2, 2
    %v646 = vld [vmem:[%s645] sm:$0x3]
    %v648 = vsel %vm49, %v646, 0
    %650 = vmatprep.subr.mxu0 0.0
    %651 = vmatpush1.msra.mxu0 %v557
    %652 = vmatprep.subr.mxu0 0.0
    %653 = vmatpush1.msra.mxu0 %v558
    %654 = vmatprep.subr.mxu0 0.0
    %655 = vmatpush1.msra.mxu0 0.0
    %656 = vmatprep.subr.mxu0 0.0
    %657 = vmatpush1.msra.mxu0 0.0
    %658 = vmatprep.subr.mxu0 0.0
    %659 = vmatpush1.msra.mxu0 0.0
    %660 = vmatprep.subr.mxu0 0.0
    %661 = vmatpush1.msra.mxu0 0.0
    %662 = vmatprep.subr.mxu0 0.0
    %663 = vmatpush1.msra.mxu0 0.0
    %664 = vmatprep.subr.mxu0 0.0
    %665 = vmatpush1.msra.mxu0 0.0
    %666 = vmatprep.subr.mxu0 0.0
    %667 = vmatpush1.msra.mxu0 0.0
    %668 = vmatprep.subr.mxu0 0.0
    %669 = vmatpush1.msra.mxu0 0.0
    %670 = vmatprep.subr.mxu0 0.0
    %671 = vmatpush1.msra.mxu0 0.0
    %672 = vmatprep.subr.mxu0 0.0
    %673 = vmatpush1.msra.mxu0 0.0
    %674 = vmatprep.subr.mxu0 0.0
    %675 = vmatpush1.msra.mxu0 0.0
    %676 = vmatprep.subr.mxu0 0.0
    %677 = vmatpush1.msra.mxu0 0.0
    %678 = vmatprep.subr.mxu0 0.0
    %679 = vmatpush1.msra.mxu0 0.0
    %680 = vmatprep.subr.mxu0 0.0
    %681 = vmatpush1.msra.mxu0 0.0
    %682 = vmatprep.subr.mxu0 0.0
    %683 = vmatpush1.msra.mxu0 0.0
    %684 = vmatprep.subr.mxu0 0.0
    %685 = vmatpush1.msra.mxu0 0.0
    %686 = vmatprep.subr.mxu0 0.0
    %687 = vmatpush1.msra.mxu0 0.0
    %688 = vmatprep.subr.mxu0 0.0
    %689 = vmatpush1.msra.mxu0 0.0
    %690 = vmatprep.subr.mxu0 0.0
    %691 = vmatpush1.msra.mxu0 0.0
    %692 = vmatprep.subr.mxu0 0.0
    %693 = vmatpush1.msra.mxu0 0.0
    %694 = vmatprep.subr.mxu0 0.0
    %695 = vmatpush1.msra.mxu0 0.0
    %696 = vmatprep.subr.mxu0 0.0
    %697 = vmatpush1.msra.mxu0 0.0
    %698 = vmatprep.subr.mxu0 0.0
    %699 = vmatpush1.msra.mxu0 0.0
    %700 = vmatprep.subr.mxu0 0.0
    %701 = vmatpush1.msra.mxu0 0.0
    %702 = vmatprep.subr.mxu0 0.0
    %703 = vmatpush1.msra.mxu0 0.0
    %704 = vmatprep.subr.mxu0 0.0
    %705 = vmatpush1.msra.mxu0 0.0
    %706 = vmatprep.subr.mxu0 0.0
    %707 = vmatpush1.msra.mxu0 0.0
    %708 = vmatprep.subr.mxu0 0.0
    %709 = vmatpush1.msra.mxu0 0.0
    %710 = vmatprep.subr.mxu0 0.0
    %711 = vmatpush1.msra.mxu0 0.0
    %712 = vmatprep.subr.mxu0 0.0
    %713 = vmatpush1.msra.mxu0 0.0
    %714 = vmatprep.mubr.f32.mxu0 0.0
    %715 = vmatmul.mubr.f32.gmra.mrb[0].mxu0 %v648
    %v716 = vpop.f32.mrb[0].mxu0
    %v717 = vadd.f32 0.0, %v716
    %v718 = vpop.f32.mrb[0].mxu0
    %719 = vdwg.mxu0
    %v721 = vsel %vm227, %v717, 0
    %723 = vmatprep.subr.mxu0 0.0
    %724 = vmatpush1.msra.mxu0 %v563
    %725 = vmatprep.subr.mxu0 0.0
    %726 = vmatpush1.msra.mxu0 %v564
    %727 = vmatprep.subr.mxu0 0.0
    %728 = vmatpush1.msra.mxu0 %v565
    %729 = vmatprep.subr.mxu0 0.0
    %730 = vmatpush1.msra.mxu0 %v566
    %731 = vmatprep.subr.mxu0 0.0
    %732 = vmatpush1.msra.mxu0 0.0
    %733 = vmatprep.subr.mxu0 0.0
    %734 = vmatpush1.msra.mxu0 0.0
    %735 = vmatprep.subr.mxu0 0.0
    %736 = vmatpush1.msra.mxu0 0.0
    %737 = vmatprep.subr.mxu0 0.0
    %738 = vmatpush1.msra.mxu0 0.0
    %739 = vmatprep.subr.mxu0 0.0
    %740 = vmatpush1.msra.mxu0 0.0
    %741 = vmatprep.subr.mxu0 0.0
    %742 = vmatpush1.msra.mxu0 0.0
    %743 = vmatprep.subr.mxu0 0.0
    %744 = vmatpush1.msra.mxu0 0.0
    %745 = vmatprep.subr.mxu0 0.0
    %746 = vmatpush1.msra.mxu0 0.0
    %747 = vmatprep.subr.mxu0 0.0
    %748 = vmatpush1.msra.mxu0 0.0
    %749 = vmatprep.subr.mxu0 0.0
    %750 = vmatpush1.msra.mxu0 0.0
    %751 = vmatprep.subr.mxu0 0.0
    %752 = vmatpush1.msra.mxu0 0.0
    %753 = vmatprep.subr.mxu0 0.0
    %754 = vmatpush1.msra.mxu0 0.0
    %755 = vmatprep.subr.mxu0 0.0
    %756 = vmatpush1.msra.mxu0 0.0
    %757 = vmatprep.subr.mxu0 0.0
    %758 = vmatpush1.msra.mxu0 0.0
    %759 = vmatprep.subr.mxu0 0.0
    %760 = vmatpush1.msra.mxu0 0.0
    %761 = vmatprep.subr.mxu0 0.0
    %762 = vmatpush1.msra.mxu0 0.0
    %763 = vmatprep.subr.mxu0 0.0
    %764 = vmatpush1.msra.mxu0 0.0
    %765 = vmatprep.subr.mxu0 0.0
    %766 = vmatpush1.msra.mxu0 0.0
    %767 = vmatprep.subr.mxu0 0.0
    %768 = vmatpush1.msra.mxu0 0.0
    %769 = vmatprep.subr.mxu0 0.0
    %770 = vmatpush1.msra.mxu0 0.0
    %771 = vmatprep.subr.mxu0 0.0
    %772 = vmatpush1.msra.mxu0 0.0
    %773 = vmatprep.subr.mxu0 0.0
    %774 = vmatpush1.msra.mxu0 0.0
    %775 = vmatprep.subr.mxu0 0.0
    %776 = vmatpush1.msra.mxu0 0.0
    %777 = vmatprep.subr.mxu0 0.0
    %778 = vmatpush1.msra.mxu0 0.0
    %779 = vmatprep.subr.mxu0 0.0
    %780 = vmatpush1.msra.mxu0 0.0
    %781 = vmatprep.subr.mxu0 0.0
    %782 = vmatpush1.msra.mxu0 0.0
    %783 = vmatprep.subr.mxu0 0.0
    %784 = vmatpush1.msra.mxu0 0.0
    %785 = vmatprep.subr.mxu0 0.0
    %786 = vmatpush1.msra.mxu0 0.0
    %787 = vmatprep.mubr.f32.mxu0 0.0
    %788 = vmatmul.mubr.f32.gmra.mrb[0].mxu0 %v721
    %v789 = vpop.f32.mrb[0].mxu0
    %v790 = vadd.f32 0.0, %v789
    %v791 = vpop.f32.mrb[0].mxu0
    %792 = vdwg.mxu0
    %v794 = vsel %vm227, %v642, 0
    %796 = vmatprep.subr.mxu0 0.0
    %797 = vmatpush1.msra.mxu0 %v559
    %798 = vmatprep.subr.mxu0 0.0
    %799 = vmatpush1.msra.mxu0 %v560
    %800 = vmatprep.subr.mxu0 0.0
    %801 = vmatpush1.msra.mxu0 %v561
    %802 = vmatprep.subr.mxu0 0.0
    %803 = vmatpush1.msra.mxu0 %v562
    %804 = vmatprep.subr.mxu0 0.0
    %805 = vmatpush1.msra.mxu0 0.0
    %806 = vmatprep.subr.mxu0 0.0
    %807 = vmatpush1.msra.mxu0 0.0
    %808 = vmatprep.subr.mxu0 0.0
    %809 = vmatpush1.msra.mxu0 0.0
    %810 = vmatprep.subr.mxu0 0.0
    %811 = vmatpush1.msra.mxu0 0.0
    %812 = vmatprep.subr.mxu0 0.0
    %813 = vmatpush1.msra.mxu0 0.0
    %814 = vmatprep.subr.mxu0 0.0
    %815 = vmatpush1.msra.mxu0 0.0
    %816 = vmatprep.subr.mxu0 0.0
    %817 = vmatpush1.msra.mxu0 0.0
    %818 = vmatprep.subr.mxu0 0.0
    %819 = vmatpush1.msra.mxu0 0.0
    %820 = vmatprep.subr.mxu0 0.0
    %821 = vmatpush1.msra.mxu0 0.0
    %822 = vmatprep.subr.mxu0 0.0
    %823 = vmatpush1.msra.mxu0 0.0
    %824 = vmatprep.subr.mxu0 0.0
    %825 = vmatpush1.msra.mxu0 0.0
    %826 = vmatprep.subr.mxu0 0.0
    %827 = vmatpush1.msra.mxu0 0.0
    %828 = vmatprep.subr.mxu0 0.0
    %829 = vmatpush1.msra.mxu0 0.0
    %830 = vmatprep.subr.mxu0 0.0
    %831 = vmatpush1.msra.mxu0 0.0
    %832 = vmatprep.subr.mxu0 0.0
    %833 = vmatpush1.msra.mxu0 0.0
    %834 = vmatprep.subr.mxu0 0.0
    %835 = vmatpush1.msra.mxu0 0.0
    %836 = vmatprep.subr.mxu0 0.0
    %837 = vmatpush1.msra.mxu0 0.0
    %838 = vmatprep.subr.mxu0 0.0
    %839 = vmatpush1.msra.mxu0 0.0
    %840 = vmatprep.subr.mxu0 0.0
    %841 = vmatpush1.msra.mxu0 0.0
    %842 = vmatprep.subr.mxu0 0.0
    %843 = vmatpush1.msra.mxu0 0.0
    %844 = vmatprep.subr.mxu0 0.0
    %845 = vmatpush1.msra.mxu0 0.0
    %846 = vmatprep.subr.mxu0 0.0
    %847 = vmatpush1.msra.mxu0 0.0
    %848 = vmatprep.subr.mxu0 0.0
    %849 = vmatpush1.msra.mxu0 0.0
    %850 = vmatprep.subr.mxu0 0.0
    %851 = vmatpush1.msra.mxu0 0.0
    %852 = vmatprep.subr.mxu0 0.0
    %853 = vmatpush1.msra.mxu0 0.0
    %854 = vmatprep.subr.mxu0 0.0
    %855 = vmatpush1.msra.mxu0 0.0
    %856 = vmatprep.subr.mxu0 0.0
    %857 = vmatpush1.msra.mxu0 0.0
    %858 = vmatprep.subr.mxu0 0.0
    %859 = vmatpush1.msra.mxu0 0.0
    %860 = vmatprep.mubr.f32.mxu0 0.0
    %861 = vmatmul.mubr.f32.gmra.mrb[0].mxu0 %v794
    %v862 = vpop.f32.mrb[0].mxu0
    %v863 = vadd.f32 %v790, %v862
    %v864 = vpop.f32.mrb[0].mxu0
    %865 = vdwg.mxu0
    %s866 = scalar_lea.vmem %s2, 4
    %v867 = vld [vmem:[%s866] sm:$0x3]
    %v869 = vsel %vm49, %v867, 0
    %871 = vmatprep.subr.mxu0 0.0
    %872 = vmatpush1.msra.mxu0 %v557
    %873 = vmatprep.subr.mxu0 0.0
    %874 = vmatpush1.msra.mxu0 %v558
    %875 = vmatprep.subr.mxu0 0.0
    %876 = vmatpush1.msra.mxu0 0.0
    %877 = vmatprep.subr.mxu0 0.0
    %878 = vmatpush1.msra.mxu0 0.0
    %879 = vmatprep.subr.mxu0 0.0
    %880 = vmatpush1.msra.mxu0 0.0
    %881 = vmatprep.subr.mxu0 0.0
    %882 = vmatpush1.msra.mxu0 0.0
    %883 = vmatprep.subr.mxu0 0.0
    %884 = vmatpush1.msra.mxu0 0.0
    %885 = vmatprep.subr.mxu0 0.0
    %886 = vmatpush1.msra.mxu0 0.0
    %887 = vmatprep.subr.mxu0 0.0
    %888 = vmatpush1.msra.mxu0 0.0
    %889 = vmatprep.subr.mxu0 0.0
    %890 = vmatpush1.msra.mxu0 0.0
    %891 = vmatprep.subr.mxu0 0.0
    %892 = vmatpush1.msra.mxu0 0.0
    %893 = vmatprep.subr.mxu0 0.0
    %894 = vmatpush1.msra.mxu0 0.0
    %895 = vmatprep.subr.mxu0 0.0
    %896 = vmatpush1.msra.mxu0 0.0
    %897 = vmatprep.subr.mxu0 0.0
    %898 = vmatpush1.msra.mxu0 0.0
    %899 = vmatprep.subr.mxu0 0.0
    %900 = vmatpush1.msra.mxu0 0.0
    %901 = vmatprep.subr.mxu0 0.0
    %902 = vmatpush1.msra.mxu0 0.0
    %903 = vmatprep.subr.mxu0 0.0
    %904 = vmatpush1.msra.mxu0 0.0
    %905 = vmatprep.subr.mxu0 0.0
    %906 = vmatpush1.msra.mxu0 0.0
    %907 = vmatprep.subr.mxu0 0.0
    %908 = vmatpush1.msra.mxu0 0.0
    %909 = vmatprep.subr.mxu0 0.0
    %910 = vmatpush1.msra.mxu0 0.0
    %911 = vmatprep.subr.mxu0 0.0
    %912 = vmatpush1.msra.mxu0 0.0
    %913 = vmatprep.subr.mxu0 0.0
    %914 = vmatpush1.msra.mxu0 0.0
    %915 = vmatprep.subr.mxu0 0.0
    %916 = vmatpush1.msra.mxu0 0.0
    %917 = vmatprep.subr.mxu0 0.0
    %918 = vmatpush1.msra.mxu0 0.0
    %919 = vmatprep.subr.mxu0 0.0
    %920 = vmatpush1.msra.mxu0 0.0
    %921 = vmatprep.subr.mxu0 0.0
    %922 = vmatpush1.msra.mxu0 0.0
    %923 = vmatprep.subr.mxu0 0.0
    %924 = vmatpush1.msra.mxu0 0.0
    %925 = vmatprep.subr.mxu0 0.0
    %926 = vmatpush1.msra.mxu0 0.0
    %927 = vmatprep.subr.mxu0 0.0
    %928 = vmatpush1.msra.mxu0 0.0
    %929 = vmatprep.subr.mxu0 0.0
    %930 = vmatpush1.msra.mxu0 0.0
    %931 = vmatprep.subr.mxu0 0.0
    %932 = vmatpush1.msra.mxu0 0.0
    %933 = vmatprep.subr.mxu0 0.0
    %934 = vmatpush1.msra.mxu0 0.0
    %935 = vmatprep.mubr.f32.mxu0 0.0
    %936 = vmatmul.mubr.f32.gmra.mrb[0].mxu0 %v869
    %v937 = vpop.f32.mrb[0].mxu0
    %v938 = vadd.f32 0.0, %v937
    %v939 = vpop.f32.mrb[0].mxu0
    %940 = vdwg.mxu0
    %v942 = vsel %vm227, %v938, 0
    %944 = vmatprep.subr.mxu0 0.0
    %945 = vmatpush1.msra.mxu0 %v567
    %946 = vmatprep.subr.mxu0 0.0
    %947 = vmatpush1.msra.mxu0 %v568
    %948 = vmatprep.subr.mxu0 0.0
    %949 = vmatpush1.msra.mxu0 %v569
    %950 = vmatprep.subr.mxu0 0.0
    %951 = vmatpush1.msra.mxu0 %v570
    %952 = vmatprep.subr.mxu0 0.0
    %953 = vmatpush1.msra.mxu0 0.0
    %954 = vmatprep.subr.mxu0 0.0
    %955 = vmatpush1.msra.mxu0 0.0
    %956 = vmatprep.subr.mxu0 0.0
    %957 = vmatpush1.msra.mxu0 0.0
    %958 = vmatprep.subr.mxu0 0.0
    %959 = vmatpush1.msra.mxu0 0.0
    %960 = vmatprep.subr.mxu0 0.0
    %961 = vmatpush1.msra.mxu0 0.0
    %962 = vmatprep.subr.mxu0 0.0
    %963 = vmatpush1.msra.mxu0 0.0
    %964 = vmatprep.subr.mxu0 0.0
    %965 = vmatpush1.msra.mxu0 0.0
    %966 = vmatprep.subr.mxu0 0.0
    %967 = vmatpush1.msra.mxu0 0.0
    %968 = vmatprep.subr.mxu0 0.0
    %969 = vmatpush1.msra.mxu0 0.0
    %970 = vmatprep.subr.mxu0 0.0
    %971 = vmatpush1.msra.mxu0 0.0
    %972 = vmatprep.subr.mxu0 0.0
    %973 = vmatpush1.msra.mxu0 0.0
    %974 = vmatprep.subr.mxu0 0.0
    %975 = vmatpush1.msra.mxu0 0.0
    %976 = vmatprep.subr.mxu0 0.0
    %977 = vmatpush1.msra.mxu0 0.0
    %978 = vmatprep.subr.mxu0 0.0
    %979 = vmatpush1.msra.mxu0 0.0
    %980 = vmatprep.subr.mxu0 0.0
    %981 = vmatpush1.msra.mxu0 0.0
    %982 = vmatprep.subr.mxu0 0.0
    %983 = vmatpush1.msra.mxu0 0.0
    %984 = vmatprep.subr.mxu0 0.0
    %985 = vmatpush1.msra.mxu0 0.0
    %986 = vmatprep.subr.mxu0 0.0
    %987 = vmatpush1.msra.mxu0 0.0
    %988 = vmatprep.subr.mxu0 0.0
    %989 = vmatpush1.msra.mxu0 0.0
    %990 = vmatprep.subr.mxu0 0.0
    %991 = vmatpush1.msra.mxu0 0.0
    %992 = vmatprep.subr.mxu0 0.0
    %993 = vmatpush1.msra.mxu0 0.0
    %994 = vmatprep.subr.mxu0 0.0
    %995 = vmatpush1.msra.mxu0 0.0
    %996 = vmatprep.subr.mxu0 0.0
    %997 = vmatpush1.msra.mxu0 0.0
    %998 = vmatprep.subr.mxu0 0.0
    %999 = vmatpush1.msra.mxu0 0.0
    %1000 = vmatprep.subr.mxu0 0.0
    %1001 = vmatpush1.msra.mxu0 0.0
    %1002 = vmatprep.subr.mxu0 0.0
    %1003 = vmatpush1.msra.mxu0 0.0
    %1004 = vmatprep.subr.mxu0 0.0
    %1005 = vmatpush1.msra.mxu0 0.0
    %1006 = vmatprep.subr.mxu0 0.0
    %1007 = vmatpush1.msra.mxu0 0.0
    %1008 = vmatprep.mubr.f32.mxu0 0.0
    %1009 = vmatmul.mubr.f32.gmra.mrb[0].mxu0 %v942
    %v1010 = vpop.f32.mrb[0].mxu0
    %v1011 = vadd.f32 0.0, %v1010
    %v1012 = vpop.f32.mrb[0].mxu0
    %1013 = vdwg.mxu0
    %v1014 = vadd.f32 %v863, %v1011
    %v1015 = vld [vmem:[%s8] sm:$0x1]
    %v1017 = vlaneseq
    %v1018 = vshrl.u32 %v1017, 7
    %v1019 = vsub.s32 0, %v1018
    %v1020 = vrot.slane %v1015, %v1019
    %v1022 = vadd.f32 %v1014, %v1020
    %v1023 = vmax.f32 %v1022, 0.0
    %v1024 = vld [vmem:[%s9] sm:$0xff]
    %v1025 = vld [vmem:[%s9 + $0x8] sm:$0xff]
    %v1026 = vld [vmem:[%s9 + $0x10] sm:$0xff]
    %v1027 = vld [vmem:[%s9 + $0x18] sm:$0xff]
    %v1028 = vld [vmem:[%s10] sm:$0x1]
    %v1030 = vlaneseq
    %v1031 = vshrl.u32 %v1030, 7
    %v1032 = vsub.s32 0, %v1031
    %v1033 = vrot.slane %v1028, %v1032
    %v1036 = vsel %vm227, %v1023, 0
    %1038 = vmatprep.subr.mxu0 0.0
    %1039 = vmatpush1.msra.mxu0 %v1024
    %1040 = vmatprep.subr.mxu0 0.0
    %1041 = vmatpush1.msra.mxu0 %v1025
    %1042 = vmatprep.subr.mxu0 0.0
    %1043 = vmatpush1.msra.mxu0 %v1026
    %1044 = vmatprep.subr.mxu0 0.0
    %1045 = vmatpush1.msra.mxu0 %v1027
    %1046 = vmatprep.subr.mxu0 0.0
    %1047 = vmatpush1.msra.mxu0 0.0
    %1048 = vmatprep.subr.mxu0 0.0
    %1049 = vmatpush1.msra.mxu0 0.0
    %1050 = vmatprep.subr.mxu0 0.0
    %1051 = vmatpush1.msra.mxu0 0.0
    %1052 = vmatprep.subr.mxu0 0.0
    %1053 = vmatpush1.msra.mxu0 0.0
    %1054 = vmatprep.subr.mxu0 0.0
    %1055 = vmatpush1.msra.mxu0 0.0
    %1056 = vmatprep.subr.mxu0 0.0
    %1057 = vmatpush1.msra.mxu0 0.0
    %1058 = vmatprep.subr.mxu0 0.0
    %1059 = vmatpush1.msra.mxu0 0.0
    %1060 = vmatprep.subr.mxu0 0.0
    %1061 = vmatpush1.msra.mxu0 0.0
    %1062 = vmatprep.subr.mxu0 0.0
    %1063 = vmatpush1.msra.mxu0 0.0
    %1064 = vmatprep.subr.mxu0 0.0
    %1065 = vmatpush1.msra.mxu0 0.0
    %1066 = vmatprep.subr.mxu0 0.0
    %1067 = vmatpush1.msra.mxu0 0.0
    %1068 = vmatprep.subr.mxu0 0.0
    %1069 = vmatpush1.msra.mxu0 0.0
    %1070 = vmatprep.subr.mxu0 0.0
    %1071 = vmatpush1.msra.mxu0 0.0
    %1072 = vmatprep.subr.mxu0 0.0
    %1073 = vmatpush1.msra.mxu0 0.0
    %1074 = vmatprep.subr.mxu0 0.0
    %1075 = vmatpush1.msra.mxu0 0.0
    %1076 = vmatprep.subr.mxu0 0.0
    %1077 = vmatpush1.msra.mxu0 0.0
    %1078 = vmatprep.subr.mxu0 0.0
    %1079 = vmatpush1.msra.mxu0 0.0
    %1080 = vmatprep.subr.mxu0 0.0
    %1081 = vmatpush1.msra.mxu0 0.0
    %1082 = vmatprep.subr.mxu0 0.0
    %1083 = vmatpush1.msra.mxu0 0.0
    %1084 = vmatprep.subr.mxu0 0.0
    %1085 = vmatpush1.msra.mxu0 0.0
    %1086 = vmatprep.subr.mxu0 0.0
    %1087 = vmatpush1.msra.mxu0 0.0
    %1088 = vmatprep.subr.mxu0 0.0
    %1089 = vmatpush1.msra.mxu0 0.0
    %1090 = vmatprep.subr.mxu0 0.0
    %1091 = vmatpush1.msra.mxu0 0.0
    %1092 = vmatprep.subr.mxu0 0.0
    %1093 = vmatpush1.msra.mxu0 0.0
    %1094 = vmatprep.subr.mxu0 0.0
    %1095 = vmatpush1.msra.mxu0 0.0
    %1096 = vmatprep.subr.mxu0 0.0
    %1097 = vmatpush1.msra.mxu0 0.0
    %1098 = vmatprep.subr.mxu0 0.0
    %1099 = vmatpush1.msra.mxu0 0.0
    %1100 = vmatprep.subr.mxu0 0.0
    %1101 = vmatpush1.msra.mxu0 0.0
    %1102 = vmatprep.mubr.f32.mxu0 0.0
    %1103 = vmatmul.mubr.f32.gmra.mrb[0].mxu0 %v1036
    %v1104 = vpop.f32.mrb[0].mxu0
    %v1105 = vadd.f32 %v1033, %v1104
    %v1106 = vpop.f32.mrb[0].mxu0
    %1107 = vdwg.mxu0
    %v1108 = vmax.f32 %v1105, 0.0
    %v1109 = vld [vmem:[%s11] sm:$0xff]
    %v1110 = vld [vmem:[%s11 + $0x8] sm:$0xff]
    %v1111 = vld [vmem:[%s12] sm:$0x1]
    %v1113 = vlaneseq
    %v1114 = vshrl.u32 %v1113, 7
    %v1115 = vsub.s32 0, %v1114
    %v1116 = vrot.slane %v1111, %v1115
    %v1119 = vsel %vm49, %v1108, 0
    %1121 = vmatprep.subr.mxu0 0.0
    %1122 = vmatpush1.msra.mxu0 %v1109
    %1123 = vmatprep.subr.mxu0 0.0
    %1124 = vmatpush1.msra.mxu0 %v1110
    %1125 = vmatprep.subr.mxu0 0.0
    %1126 = vmatpush1.msra.mxu0 0.0
    %1127 = vmatprep.subr.mxu0 0.0
    %1128 = vmatpush1.msra.mxu0 0.0
    %1129 = vmatprep.subr.mxu0 0.0
    %1130 = vmatpush1.msra.mxu0 0.0
    %1131 = vmatprep.subr.mxu0 0.0
    %1132 = vmatpush1.msra.mxu0 0.0
    %1133 = vmatprep.subr.mxu0 0.0
    %1134 = vmatpush1.msra.mxu0 0.0
    %1135 = vmatprep.subr.mxu0 0.0
    %1136 = vmatpush1.msra.mxu0 0.0
    %1137 = vmatprep.subr.mxu0 0.0
    %1138 = vmatpush1.msra.mxu0 0.0
    %1139 = vmatprep.subr.mxu0 0.0
    %1140 = vmatpush1.msra.mxu0 0.0
    %1141 = vmatprep.subr.mxu0 0.0
    %1142 = vmatpush1.msra.mxu0 0.0
    %1143 = vmatprep.subr.mxu0 0.0
    %1144 = vmatpush1.msra.mxu0 0.0
    %1145 = vmatprep.subr.mxu0 0.0
    %1146 = vmatpush1.msra.mxu0 0.0
    %1147 = vmatprep.subr.mxu0 0.0
    %1148 = vmatpush1.msra.mxu0 0.0
    %1149 = vmatprep.subr.mxu0 0.0
    %1150 = vmatpush1.msra.mxu0 0.0
    %1151 = vmatprep.subr.mxu0 0.0
    %1152 = vmatpush1.msra.mxu0 0.0
    %1153 = vmatprep.subr.mxu0 0.0
    %1154 = vmatpush1.msra.mxu0 0.0
    %1155 = vmatprep.subr.mxu0 0.0
    %1156 = vmatpush1.msra.mxu0 0.0
    %1157 = vmatprep.subr.mxu0 0.0
    %1158 = vmatpush1.msra.mxu0 0.0
    %1159 = vmatprep.subr.mxu0 0.0
    %1160 = vmatpush1.msra.mxu0 0.0
    %1161 = vmatprep.subr.mxu0 0.0
    %1162 = vmatpush1.msra.mxu0 0.0
    %1163 = vmatprep.subr.mxu0 0.0
    %1164 = vmatpush1.msra.mxu0 0.0
    %1165 = vmatprep.subr.mxu0 0.0
    %1166 = vmatpush1.msra.mxu0 0.0
    %1167 = vmatprep.subr.mxu0 0.0
    %1168 = vmatpush1.msra.mxu0 0.0
    %1169 = vmatprep.subr.mxu0 0.0
    %1170 = vmatpush1.msra.mxu0 0.0
    %1171 = vmatprep.subr.mxu0 0.0
    %1172 = vmatpush1.msra.mxu0 0.0
    %1173 = vmatprep.subr.mxu0 0.0
    %1174 = vmatpush1.msra.mxu0 0.0
    %1175 = vmatprep.subr.mxu0 0.0
    %1176 = vmatpush1.msra.mxu0 0.0
    %1177 = vmatprep.subr.mxu0 0.0
    %1178 = vmatpush1.msra.mxu0 0.0
    %1179 = vmatprep.subr.mxu0 0.0
    %1180 = vmatpush1.msra.mxu0 0.0
    %1181 = vmatprep.subr.mxu0 0.0
    %1182 = vmatpush1.msra.mxu0 0.0
    %1183 = vmatprep.subr.mxu0 0.0
    %1184 = vmatpush1.msra.mxu0 0.0
    %1185 = vmatprep.mubr.f32.mxu0 0.0
    %1186 = vmatmul.mubr.f32.gmra.mrb[0].mxu0 %v1119
    %v1187 = vpop.f32.mrb[0].mxu0
    %v1188 = vadd.f32 %v1116, %v1187
    %v1189 = vpop.f32.mrb[0].mxu0
    %1190 = vdwg.mxu0
    %vm1191 = vcmask 25600
    %v1192 = vsel %vm1191, %v1188, -inf
    %1193 = vmax.xlane.f32.xlu0 %v1192
    %v1194 = vpop.xlane.xlu0 %1193
    %v1195 = vsub.f32 %v1188, %v1194
    %v1196 = vmul.f32 %v1195, 1.442695
    %v1197 = vpow.pop %v1196
    %v1198 = vsel %vm1191, %v1197, 0.0
    %1199 = vadd.xlane.f32.xlu0 %v1198
    %v1200 = vpop.xlane.xlu0 %1199
    %v1201 = vlog2.pop %v1200
    %v1202 = vmul.f32 %v1201, 0.6931472
    %v1203 = vadd.f32 %v1202, %v1194
    %v1204 = vsub.f32 %v1188, %v1203
    %1205 = vst.msk [vmem:[#allocation2] sm:$0x3] %vm1191, %v1204
    // Predicated region
    $region54: #{tpu_custom_call.1} parent=1 // pred_check
      _
    $region55: #{tpu_custom_call.1} parent=1 // pred_check_branch
      %1207 = sbr.rel (0) target = $region57
    $region56: #{tpu_custom_call.1} parent=1 // pred_region
      %s1209 = ssub.s32 32, 32
      %1210 = vsyncadd [#allocation3], %s1209
      %s1212 = sshll.u32 [#allocation2], 4
      %s1213 = int_to_ptr.vmem [resolvable:$true] %s1212
      %1215 = dma.vmem_to_hbm [thread:$0]  %s1213, 32, %s13, [#allocation3]
    $region57: #{tpu_custom_call.1} parent=1 // pred_fallthru
      _
    // Predicated region
    $region58: #{tpu_custom_call.1} parent=1 // pred_check
      _
    $region59: #{tpu_custom_call.1} parent=1 // pred_check_branch
      %1217 = sbr.rel (0) target = $region61
    $region60: #{tpu_custom_call.1} parent=1 // pred_region
      %1218 = dma.done [#allocation3], 32
    $region61: #{tpu_custom_call.1} parent=1 // pred_fallthru
      _
    %1219 = vsyncpa [#allocation3], 1

</llo_original>
